<compile_context>
chip_gen: v6e
topology: v6e:2x2x1
jax: 0.10.0
libtpu: 0.0.40
codegen_flags: <defaults>
</compile_context>

<pallas_src>
import functools

import jax
import jax.numpy as jnp
from jax.experimental import pallas as pl
from jax.experimental.pallas import tpu as pltpu

# Same padding constant as the torch module (rounds to -2^31 in f32, exactly as
# torch's float tensor does; exp() underflows to 0 either way).
_MASK_PAD = float(-2 ** 31 + 1)


def _weighted_seq_kernel_folded(len_ref, seq_ref, w_ref, o_ref, *,
                                T: int, E: int, weight_normalization: bool):
    """Lane-dense path: seq/out are viewed as (TB, T*E)."""
    TE = T * E
    TB = w_ref.shape[0]

    length = len_ref[...]                                         # (TB, 1) i32
    t_idx = jax.lax.broadcasted_iota(jnp.int32, (TB, T), 1)
    mask = t_idx < length                                         # (TB, T)

    w = w_ref[...].astype(jnp.float32)                            # (TB, T)
    if weight_normalization:
        w = jnp.where(mask, w, _MASK_PAD)
        w = w - jnp.max(w, axis=-1, keepdims=True)                # lane reduce
        e = jnp.exp(w)
        denom = jnp.sum(e, axis=-1, keepdims=True)
        w = e * pl.reciprocal(denom, approx=False)
    else:
        w = jnp.where(mask, w, 0.0)

    # Expand (TB, T) -> (TB, T*E) with a one-hot matmul on the idle MXU.
    # onehot[t, j] = 1.0  iff  t*E <= j < (t+1)*E   (i.e. j // E == t)
    lane_j = jax.lax.broadcasted_iota(jnp.int32, (T, TE), 1)
    row_t = jax.lax.broadcasted_iota(jnp.int32, (T, TE), 0)
    onehot = jnp.logical_and(lane_j >= row_t * E,
                             lane_j < (row_t + 1) * E).astype(jnp.float32)
    w_exp = jnp.dot(w, onehot,
                    preferred_element_type=jnp.float32,
                    precision=jax.lax.Precision.HIGHEST)          # (TB, T*E)

    o_ref[...] = (seq_ref[...].astype(jnp.float32) * w_exp).astype(o_ref.dtype)


def _weighted_seq_kernel_3d(len_ref, seq_ref, w_ref, o_ref, *,
                            weight_normalization: bool):
    """Fallback path: (TB, T, E) blocks (used when E is already lane-dense,
    i.e. a multiple of 128, or the one-hot expansion matrix would be large)."""
    TB, T, _ = w_ref.shape
    length = len_ref[...]                                         # (TB, 1, 1)
    t_idx = jax.lax.broadcasted_iota(jnp.int32, (TB, T, 1), 1)
    mask = t_idx < length

    w = w_ref[...].astype(jnp.float32)                            # (TB, T, 1)
    if weight_normalization:
        w = jnp.where(mask, w, _MASK_PAD)
        w = w - jnp.max(w, axis=1, keepdims=True)
        e = jnp.exp(w)
        w = e * pl.reciprocal(jnp.sum(e, axis=1, keepdims=True), approx=False)
    else:
        w = jnp.where(mask, w, 0.0)

    o_ref[...] = (seq_ref[...].astype(jnp.float32) * w).astype(o_ref.dtype)


def _choose_batch_rows(B, bytes_per_row, target_bytes=2 << 20):
    """Batch-tile height: ~target_bytes per buffer, second-minor-dim friendly
    (multiple of 32 or the full batch), and >= 2 grid steps for large batches
    so v7x's second TensorCore gets work."""
    tb = max(1, target_bytes // max(bytes_per_row, 1))
    if tb >= B:
        if B >= 64:
            tb = min(B, ((B + 1) // 2 + 31) // 32 * 32)
        else:
            tb = B
    else:
        tb = min(B, max(32, (tb // 32) * 32))
    return tb


def weighted_sequence_layer(seq_value, seq_len, weight, *,
                            weight_normalization=True, block_rows=None):
    """mask_zero=False path of WeightedSequenceLayer.

    seq_value: (B, T, E) float (any float dtype; cast in-kernel)
    seq_len:   (B, 1)    int
    weight:    (B, T)    float
    returns    (B, T, E) float32
    """
    # TODO(synk): mask_zero=True path (explicit (B, T) boolean mask input) is
    # not wired up; only the seq_len-derived mask path is implemented.
    B, T, E = seq_value.shape
    seq_len_i32 = seq_len.reshape(B, 1).astype(jnp.int32)
    w2 = weight.reshape(B, T).astype(jnp.float32)

    itemsize = jnp.dtype(seq_value.dtype).itemsize
    tb = block_rows if block_rows is not None else _choose_batch_rows(
        B, T * E * max(itemsize, 4))
    grid = (pl.cdiv(B, tb),)

    compiler_params = pltpu.CompilerParams(
        dimension_semantics=("parallel",),
        # Above the v5e (16 MiB) / v6e (32 MiB) scoped defaults, but still well
        # inside v7x's 64 MiB physical VMEM per TensorCore.
        vmem_limit_bytes=48 * 1024 * 1024,
    )

    onehot_bytes = T * T * E * 4
    use_folded = (E % 128 != 0) and (onehot_bytes <= 4 * 1024 * 1024)

    if use_folded:
        kernel = functools.partial(_weighted_seq_kernel_folded, T=T, E=E,
                                   weight_normalization=weight_normalization)
        out = pl.pallas_call(
            kernel,
            out_shape=jax.ShapeDtypeStruct((B, T * E), jnp.float32),
            grid=grid,
            in_specs=[
                pl.BlockSpec((tb, 1), lambda b: (b, 0)),        # seq_len
                pl.BlockSpec((tb, T * E), lambda b: (b, 0)),    # seq (folded)
                pl.BlockSpec((tb, T), lambda b: (b, 0)),        # weight
            ],
            out_specs=pl.BlockSpec((tb, T * E), lambda b: (b, 0)),
            compiler_params=compiler_params,
        )(seq_len_i32, seq_value.reshape(B, T * E), w2)
        return out.reshape(B, T, E)

    kernel = functools.partial(_weighted_seq_kernel_3d,
                               weight_normalization=weight_normalization)
    return pl.pallas_call(
        kernel,
        out_shape=jax.ShapeDtypeStruct((B, T, E), jnp.float32),
        grid=grid,
        in_specs=[
            pl.BlockSpec((tb, 1, 1), lambda b: (b, 0, 0)),      # seq_len
            pl.BlockSpec((tb, T, E), lambda b: (b, 0, 0)),      # seq
            pl.BlockSpec((tb, T, 1), lambda b: (b, 0, 0)),      # weight
        ],
        out_specs=pl.BlockSpec((tb, T, E), lambda b: (b, 0, 0)),
        compiler_params=compiler_params,
    )(seq_len_i32.reshape(B, 1, 1), seq_value, w2.reshape(B, T, 1))


def _reference(seq_value, seq_len, weight, weight_normalization=True):
    B, T, E = seq_value.shape
    mask = jnp.arange(T)[None, :] < seq_len.reshape(B, 1)
    w = weight.astype(jnp.float32)
    pad = jnp.full_like(w, _MASK_PAD) if weight_normalization else jnp.zeros_like(w)
    w = jnp.where(mask, w, pad)
    if weight_normalization:
        w = jax.nn.softmax(w, axis=1)
    return seq_value.astype(jnp.float32) * w[:, :, None]


if __name__ == "__main__":
    key = jax.random.PRNGKey(0)
    k1, k2, k3, k4 = jax.random.split(key, 4)

    # Case 1: lane-dense folded path (E = 32 < 128), both normalization modes.
    B, T, E = 2, 8, 32
    seq_value = jax.random.normal(k1, (B, T, E), dtype=jnp.float32)
    weight = jax.random.normal(k2, (B, T), dtype=jnp.float32)
    seq_len = jnp.array([[5], [3]], dtype=jnp.int32)

    for wn in (True, False):
        out = jax.block_until_ready(
            weighted_sequence_layer(seq_value, seq_len, weight,
                                    weight_normalization=wn))
        ref = _reference(seq_value, seq_len, weight, weight_normalization=wn)
        assert out.shape == (B, T, E)
        assert jnp.allclose(out, ref, atol=1e-5, rtol=1e-5), f"mismatch wn={wn}"

    # Case 2: batch-tiled grid (two blocks of 8 rows), includes seq_len == 0.
    B2, T2, E2 = 16, 8, 32
    sv2 = jax.random.normal(k3, (B2, T2, E2), dtype=jnp.float32)
    w2 = jax.random.normal(k4, (B2, T2), dtype=jnp.float32)
    sl2 = (jnp.arange(B2, dtype=jnp.int32) % (T2 + 1)).reshape(B2, 1)
    out2 = jax.block_until_ready(
        weighted_sequence_layer(sv2, sl2, w2, weight_normalization=True,
                                block_rows=8))
    ref2 = _reference(sv2, sl2, w2, weight_normalization=True)
    assert jnp.allclose(out2, ref2, atol=1e-5, rtol=1e-5), "mismatch tiled"

    # Case 3: 3D fallback path (E is a multiple of 128, already lane-dense).
    B3, T3, E3 = 2, 8, 128
    sv3 = jax.random.normal(k1, (B3, T3, E3), dtype=jnp.float32)
    w3 = jax.random.normal(k2, (B3, T3), dtype=jnp.float32)
    sl3 = jnp.array([[7], [2]], dtype=jnp.int32)
    out3 = jax.block_until_ready(
        weighted_sequence_layer(sv3, sl3, w3, weight_normalization=True))
    ref3 = _reference(sv3, sl3, w3, weight_normalization=True)
    assert jnp.allclose(out3, ref3, atol=1e-5, rtol=1e-5), "mismatch 3d path"

    print("KERNEL_OK")
</pallas_src>

<mosaic_0001>
module attributes {stable_mosaic.version = 11 : i64} {
  func.func @_weighted_seq_kernel_folded(%arg0: i32, %arg1: memref<2x1xi32, #tpu.memory_space<vmem>>, %arg2: memref<2x256xf32, #tpu.memory_space<vmem>>, %arg3: memref<2x8xf32, #tpu.memory_space<vmem>>, %arg4: memref<2x256xf32, #tpu.memory_space<vmem>>) attributes {dimension_semantics = [#tpu.dimension_semantics<parallel>], iteration_bounds = array<i64: 1>, scalar_prefetch = 0 : i64, scratch_operands = 0 : i64, tpu.core_type = #tpu.core_type<tc>, window_params = [{transform_indices = @transform_0, window_bounds = array<i64: 2, 1>}, {transform_indices = @transform_1, window_bounds = array<i64: 2, 256>}, {transform_indices = @transform_2, window_bounds = array<i64: 2, 8>}, {transform_indices = @transform_3, window_bounds = array<i64: 2, 256>}]} {
    %c0 = arith.constant 0 : index
    %c0_0 = arith.constant 0 : index
    %0 = vector.load %arg1[%c0, %c0_0] : memref<2x1xi32, #tpu.memory_space<vmem>>, vector<2x1xi32>
    %1 = tpu.iota {dimensions = array<i32: 1>} : vector<2x8xi32>
    %2 = vector.broadcast %0 : vector<2x1xi32> to vector<2x8xi32>
    %3 = arith.cmpi slt, %1, %2 : vector<2x8xi32>
    %c0_1 = arith.constant 0 : index
    %c0_2 = arith.constant 0 : index
    %4 = vector.load %arg3[%c0_1, %c0_2] : memref<2x8xf32, #tpu.memory_space<vmem>>, vector<2x8xf32>
    %cst = arith.constant -2.14748365E+9 : f32
    %5 = vector.broadcast %cst : f32 to vector<2x8xf32>
    %6 = arith.select %3, %4, %5 : vector<2x8xi1>, vector<2x8xf32>
    %cst_3 = arith.constant dense<0xFF800000> : vector<2xf32>
    %7 = vector.multi_reduction <maximumf>, %6, %cst_3 [1] : vector<2x8xf32> to vector<2xf32>
    %8 = vector.shape_cast %7 : vector<2xf32> to vector<2x1xf32>
    %9 = vector.broadcast %8 : vector<2x1xf32> to vector<2x8xf32>
    %10 = arith.subf %6, %9 : vector<2x8xf32>
    %11 = math.exp %10 : vector<2x8xf32>
    %cst_4 = arith.constant dense<0.000000e+00> : vector<2xf32>
    %12 = vector.multi_reduction <add>, %11, %cst_4 [1] : vector<2x8xf32> to vector<2xf32>
    %13 = vector.shape_cast %12 : vector<2xf32> to vector<2x1xf32>
    %14 = tpu.reciprocal %13 : vector<2x1xf32> -> vector<2x1xf32>
    %15 = vector.broadcast %14 : vector<2x1xf32> to vector<2x8xf32>
    %16 = arith.mulf %11, %15 : vector<2x8xf32>
    %17 = tpu.iota {dimensions = array<i32: 1>} : vector<8x256xi32>
    %18 = tpu.iota {dimensions = array<i32: 0>} : vector<8x256xi32>
    %c32_i32 = arith.constant 32 : i32
    %19 = vector.broadcast %c32_i32 : i32 to vector<8x256xi32>
    %20 = arith.muli %18, %19 : vector<8x256xi32>
    %21 = arith.cmpi sge, %17, %20 : vector<8x256xi32>
    %c1_i32 = arith.constant 1 : i32
    %22 = vector.broadcast %c1_i32 : i32 to vector<8x256xi32>
    %23 = arith.addi %18, %22 : vector<8x256xi32>
    %c32_i32_5 = arith.constant 32 : i32
    %24 = vector.broadcast %c32_i32_5 : i32 to vector<8x256xi32>
    %25 = arith.muli %23, %24 : vector<8x256xi32>
    %26 = arith.cmpi slt, %17, %25 : vector<8x256xi32>
    %27 = arith.andi %21, %26 : vector<8x256xi1>
    %28 = arith.extui %27 : vector<8x256xi1> to vector<8x256xi32>
    %29 = arith.sitofp %28 : vector<8x256xi32> to vector<8x256xf32>
    %cst_6 = arith.constant dense<0.000000e+00> : vector<2x256xf32>
    %30 = tpu.matmul %16, %29, %cst_6 {dimension_numbers = #tpu.dot_dimension_numbers<[1], [0], [0], [1], [0, 0, 1, 1], [], []>, precision = #tpu.contract_precision<fp32>} : vector<2x8xf32>, vector<8x256xf32>, vector<2x256xf32> -> vector<2x256xf32>
    %c0_7 = arith.constant 0 : index
    %c0_8 = arith.constant 0 : index
    %31 = vector.load %arg2[%c0_7, %c0_8] : memref<2x256xf32, #tpu.memory_space<vmem>>, vector<2x256xf32>
    %32 = arith.mulf %31, %30 : vector<2x256xf32>
    %c0_9 = arith.constant 0 : index
    %c0_10 = arith.constant 0 : index
    %33 = vector.load %arg4[%c0_9, %c0_10] : memref<2x256xf32, #tpu.memory_space<vmem>>, vector<2x256xf32>
    tpu.vector_store %arg4[%c0_9, %c0_10], %32 {strides = array<i32>} : memref<2x256xf32, #tpu.memory_space<vmem>>, vector<2x256xf32>,
    return
  }
  func.func @transform_0(%arg0: i32) -> (i32, i32) {
    %c0_i32 = arith.constant 0 : i32
    %c0_i32_0 = arith.constant 0 : i32
    return %arg0, %c0_i32 : i32, i32
  }
  func.func @transform_1(%arg0: i32) -> (i32, i32) {
    %c0_i32 = arith.constant 0 : i32
    %c0_i32_0 = arith.constant 0 : i32
    return %arg0, %c0_i32 : i32, i32
  }
  func.func @transform_2(%arg0: i32) -> (i32, i32) {
    %c0_i32 = arith.constant 0 : i32
    %c0_i32_0 = arith.constant 0 : i32
    return %arg0, %c0_i32 : i32, i32
  }
  func.func @transform_3(%arg0: i32) -> (i32, i32) {
    %c0_i32 = arith.constant 0 : i32
    %c0_i32_0 = arith.constant 0 : i32
    return %arg0, %c0_i32 : i32, i32
  }
}

</mosaic_0001>

<llo_original>
// kernel: tpu_custom_call.1
$region0: #{tpu_custom_call.1}
  #allocation0 [shape = 'u32[]', space=smem, size = 0x4, offset = 0x4, fixed_abs, tag = 'smem constant byte address 0x4 - core index']
  #allocation1 [shape = 'u32[144,128]{1,0:T(1,128)}', space=vmem, size = 0x12000, scoped, tag = 'internal scratch']
  %s0 = inlined_call_operand.vmem [shape: s32[2,1], index: 0, kind: input, shape index: {}]
  %s1 = inlined_call_operand.vmem [shape: f32[2,256], index: 1, kind: input, shape index: {}]
  %s2 = inlined_call_operand.vmem [shape: f32[2,8], index: 2, kind: input, shape index: {}]
  %s3 = inlined_call_operand.hbm [shape: f32[2,256], index: 3, kind: output, shape index: {}]
  %s4 = sld [smem:[#allocation0]]
  $region22: #{tpu_custom_call.1} parent=0
    _
  %s6 = ssub.s32 1, %s4
  %s7 = scalar_select 0, %s6, %s4
  $region1: #{tpu_custom_call.1} parent=0
    #allocation2 [shape = 'u8[2048]{0}', space=vmem, size = 0x800, scoped, tag = 'output window, operand 0, single buffered']
    #allocation3 [shape = 's32[1]{0}', space=sflag, size = 0x4, scoped, tag = 'scoped memory for tpu_custom_call.1']
    %8 = vsyncpa [#allocation3], 0
    // Predicated region
    $region2: #{tpu_custom_call.1} parent=1 // pred_check
      _
    $region3: #{tpu_custom_call.1} parent=1 // pred_check_branch
      %10 = sbr.rel (0) target = $region5
    $region4: #{tpu_custom_call.1} parent=1 // pred_region
      _
    $region5: #{tpu_custom_call.1} parent=1 // pred_fallthru
      _
    // Predicated region
    $region6: #{tpu_custom_call.1} parent=1 // pred_check
      _
    $region7: #{tpu_custom_call.1} parent=1 // pred_check_branch
      %12 = sbr.rel (0) target = $region9
    $region8: #{tpu_custom_call.1} parent=1 // pred_region
      _
    $region9: #{tpu_custom_call.1} parent=1 // pred_fallthru
      _
    // Predicated region
    $region10: #{tpu_custom_call.1} parent=1 // pred_check
      _
    $region11: #{tpu_custom_call.1} parent=1 // pred_check_branch
      %14 = sbr.rel (0) target = $region13
    $region12: #{tpu_custom_call.1} parent=1 // pred_region
      _
    $region13: #{tpu_custom_call.1} parent=1 // pred_fallthru
      _
    %v15 = vld [vmem:[%s0] sm:$0x3]
    %v16 = vlaneseq
    %v17 = vand.u32 %v16, 127
    %18 = vset.pattern.permute.xlu0 0
    %19 = vperm.xlu0 %18, %v15
    %v20 = vpop.permute.xlu0 %19
    %vm21 = vcmp.lt.s32.totalorder %v17, %v20
    %v22 = vld [vmem:[%s2] sm:$0x3]
    %v23 = vsel %vm21, %v22, -2.1474836e+09
    %vm24 = vcmask 58368
    %v25 = vsel %vm24, %v23, -inf
    %26 = vmax.xlane.f32.xlu0 %v25
    %v27 = vpop.xlane.xlu0 %26
    %v28 = vsub.f32 %v23, %v27
    %v29 = vmul.f32 %v28, 1.442695
    %v30 = vpow.pop %v29
    %v31 = vsel %vm24, %v30, 0.0
    %32 = vadd.xlane.f32.xlu0 %v31
    %v33 = vpop.xlane.xlu0 %32
    %v34 = vrcp.pop %v33
    %v35 = vmul.f32 %v30, %v34
    %v36 = vadd.s32 %v17, 128
    %v37 = vlaneseq
    %v38 = vshrl.u32 %v37, 7
    %v39 = vmul.u32 %v38, 32
    %vm40 = vcmp.ge.s32.totalorder %v17, %v39
    %vm41 = vcmp.ge.s32.totalorder %v36, %v39
    %v42 = vadd.s32 %v38, 1
    %v43 = vmul.u32 %v42, 32
    %vm44 = vcmp.lt.s32.totalorder %v17, %v43
    %vm45 = vcmp.lt.s32.totalorder %v36, %v43
    %vm46 = vmand %vm40, %vm44
    %vm47 = vmand %vm41, %vm45
    %v48 = vsel %vm46, 1, 0
    %v49 = vsel %vm47, 1, 0
    %v50 = vcvt.s32.f32 %v48
    %v51 = vcvt.s32.f32 %v49
    %vm52 = vcmask 64512
    %v54 = vsel %vm52, %v35, 0
    %56 = vmatprep.subr.mxu0 0.0
    %57 = vmatpush1.msra.mxu0 0.0
    %58 = vmatprep.subr.mxu0 0.0
    %59 = vmatpush1.msra.mxu0 0.0
    %60 = vmatprep.subr.mxu0 0.0
    %61 = vmatpush1.msra.mxu0 0.0
    %62 = vmatprep.subr.mxu0 0.0
    %63 = vmatpush1.msra.mxu0 0.0
    %64 = vmatprep.subr.mxu0 0.0
    %65 = vmatpush1.msra.mxu0 0.0
    %66 = vmatprep.subr.mxu0 0.0
    %67 = vmatpush1.msra.mxu0 0.0
    %68 = vmatprep.subr.mxu0 0.0
    %69 = vmatpush1.msra.mxu0 0.0
    %70 = vmatprep.subr.mxu0 0.0
    %71 = vmatpush1.msra.mxu0 0.0
    %72 = vmatprep.subr.mxu0 0.0
    %73 = vmatpush1.msra.mxu0 0.0
    %74 = vmatprep.subr.mxu0 0.0
    %75 = vmatpush1.msra.mxu0 0.0
    %76 = vmatprep.subr.mxu0 0.0
    %77 = vmatpush1.msra.mxu0 0.0
    %78 = vmatprep.subr.mxu0 0.0
    %79 = vmatpush1.msra.mxu0 0.0
    %80 = vmatprep.subr.mxu0 0.0
    %81 = vmatpush1.msra.mxu0 0.0
    %82 = vmatprep.subr.mxu0 0.0
    %83 = vmatpush1.msra.mxu0 0.0
    %84 = vmatprep.subr.mxu0 0.0
    %85 = vmatpush1.msra.mxu0 0.0
    %v86 = vand.u32 %v51, 4294901760
    %87 = vmatprep.subr.mxu0 %v86
    %v88 = vand.u32 %v50, 4294901760
    %89 = vmatpush1.msra.mxu0 %v88
    %90 = vmatprep.subr.mxu0 0.0
    %91 = vmatpush2.msra.mxu0 0.0
    %92 = vmatprep.subr.mxu0 0.0
    %93 = vmatpush2.msra.mxu0 0.0
    %94 = vmatprep.subr.mxu0 0.0
    %95 = vmatpush2.msra.mxu0 0.0
    %96 = vmatprep.subr.mxu0 0.0
    %97 = vmatpush2.msra.mxu0 0.0
    %98 = vmatprep.subr.mxu0 0.0
    %99 = vmatpush2.msra.mxu0 0.0
    %100 = vmatprep.subr.mxu0 0.0
    %101 = vmatpush2.msra.mxu0 0.0
    %102 = vmatprep.subr.mxu0 0.0
    %103 = vmatpush2.msra.mxu0 0.0
    %104 = vmatprep.subr.mxu0 0.0
    %105 = vmatpush2.msra.mxu0 0.0
    %106 = vmatprep.subr.mxu0 0.0
    %107 = vmatpush2.msra.mxu0 0.0
    %108 = vmatprep.subr.mxu0 0.0
    %109 = vmatpush2.msra.mxu0 0.0
    %110 = vmatprep.subr.mxu0 0.0
    %111 = vmatpush2.msra.mxu0 0.0
    %112 = vmatprep.subr.mxu0 0.0
    %113 = vmatpush2.msra.mxu0 0.0
    %114 = vmatprep.subr.mxu0 0.0
    %115 = vmatpush2.msra.mxu0 0.0
    %116 = vmatprep.subr.mxu0 0.0
    %117 = vmatpush2.msra.mxu0 0.0
    %118 = vmatprep.subr.mxu0 0.0
    %119 = vmatpush2.msra.mxu0 0.0
    %120 = vmatprep.subr.mxu0 0.0
    %121 = vmatpush2.msra.mxu0 0.0
    %122 = vmatprep.mubr.f32.mxu0 0.0
    %v123 = vand.u32 %v54, 4294901760
    %v124 = vsub.f32 %v54, %v123
    %v125 = vand.u32 %v124, 4294901760
    %v126 = vsub.f32 %v124, %v125
    %v127 = vand.u32 %v126, 4294901760
    %128 = vmatmul.mubr.f32.gmra.mxu0 %v127
    %v129 = vpop.f32.mrf.mxu0
    %v130 = vadd.f32 0.0, %v129
    %v131 = vpop.f32.mrf.mxu0
    %v132 = vadd.f32 0.0, %v131
    %133 = vdwg.mxu0
    %134 = vmatprep.subr.mxu0 0.0
    %135 = vmatpush1.msra.mxu0 0.0
    %136 = vmatprep.subr.mxu0 0.0
    %137 = vmatpush1.msra.mxu0 0.0
    %138 = vmatprep.subr.mxu0 0.0
    %139 = vmatpush1.msra.mxu0 0.0
    %140 = vmatprep.subr.mxu0 0.0
    %141 = vmatpush1.msra.mxu0 0.0
    %142 = vmatprep.subr.mxu0 0.0
    %143 = vmatpush1.msra.mxu0 0.0
    %144 = vmatprep.subr.mxu0 0.0
    %145 = vmatpush1.msra.mxu0 0.0
    %146 = vmatprep.subr.mxu0 0.0
    %147 = vmatpush1.msra.mxu0 0.0
    %148 = vmatprep.subr.mxu0 0.0
    %149 = vmatpush1.msra.mxu0 0.0
    %150 = vmatprep.subr.mxu0 0.0
    %151 = vmatpush1.msra.mxu0 0.0
    %152 = vmatprep.subr.mxu0 0.0
    %153 = vmatpush1.msra.mxu0 0.0
    %154 = vmatprep.subr.mxu0 0.0
    %155 = vmatpush1.msra.mxu0 0.0
    %156 = vmatprep.subr.mxu0 0.0
    %157 = vmatpush1.msra.mxu0 0.0
    %158 = vmatprep.subr.mxu0 0.0
    %159 = vmatpush1.msra.mxu0 0.0
    %160 = vmatprep.subr.mxu0 0.0
    %161 = vmatpush1.msra.mxu0 0.0
    %162 = vmatprep.subr.mxu0 0.0
    %163 = vmatpush1.msra.mxu0 0.0
    %v164 = vand.u32 %v51, 4294901760
    %v165 = vsub.f32 %v51, %v164
    %v166 = vand.u32 %v165, 4294901760
    %v167 = vsub.f32 %v165, %v166
    %v168 = vand.u32 %v167, 4294901760
    %169 = vmatprep.subr.mxu0 %v168
    %v170 = vand.u32 %v50, 4294901760
    %v171 = vsub.f32 %v50, %v170
    %v172 = vand.u32 %v171, 4294901760
    %v173 = vsub.f32 %v171, %v172
    %v174 = vand.u32 %v173, 4294901760
    %175 = vmatpush1.msra.mxu0 %v174
    %176 = vmatprep.subr.mxu0 0.0
    %177 = vmatpush2.msra.mxu0 0.0
    %178 = vmatprep.subr.mxu0 0.0
    %179 = vmatpush2.msra.mxu0 0.0
    %180 = vmatprep.subr.mxu0 0.0
    %181 = vmatpush2.msra.mxu0 0.0
    %182 = vmatprep.subr.mxu0 0.0
    %183 = vmatpush2.msra.mxu0 0.0
    %184 = vmatprep.subr.mxu0 0.0
    %185 = vmatpush2.msra.mxu0 0.0
    %186 = vmatprep.subr.mxu0 0.0
    %187 = vmatpush2.msra.mxu0 0.0
    %188 = vmatprep.subr.mxu0 0.0
    %189 = vmatpush2.msra.mxu0 0.0
    %190 = vmatprep.subr.mxu0 0.0
    %191 = vmatpush2.msra.mxu0 0.0
    %192 = vmatprep.subr.mxu0 0.0
    %193 = vmatpush2.msra.mxu0 0.0
    %194 = vmatprep.subr.mxu0 0.0
    %195 = vmatpush2.msra.mxu0 0.0
    %196 = vmatprep.subr.mxu0 0.0
    %197 = vmatpush2.msra.mxu0 0.0
    %198 = vmatprep.subr.mxu0 0.0
    %199 = vmatpush2.msra.mxu0 0.0
    %200 = vmatprep.subr.mxu0 0.0
    %201 = vmatpush2.msra.mxu0 0.0
    %202 = vmatprep.subr.mxu0 0.0
    %203 = vmatpush2.msra.mxu0 0.0
    %204 = vmatprep.subr.mxu0 0.0
    %205 = vmatpush2.msra.mxu0 0.0
    %206 = vmatprep.subr.mxu0 0.0
    %207 = vmatpush2.msra.mxu0 0.0
    %208 = vmatprep.mubr.f32.mxu0 0.0
    %v209 = vand.u32 %v54, 4294901760
    %210 = vmatmul.mubr.f32.gmra.mxu0 %v209
    %v211 = vpop.f32.mrf.mxu0
    %v212 = vadd.f32 %v130, %v211
    %v213 = vpop.f32.mrf.mxu0
    %v214 = vadd.f32 %v132, %v213
    %215 = vdwg.mxu0
    %216 = vmatprep.subr.mxu0 0.0
    %217 = vmatpush1.msra.mxu0 0.0
    %218 = vmatprep.subr.mxu0 0.0
    %219 = vmatpush1.msra.mxu0 0.0
    %220 = vmatprep.subr.mxu0 0.0
    %221 = vmatpush1.msra.mxu0 0.0
    %222 = vmatprep.subr.mxu0 0.0
    %223 = vmatpush1.msra.mxu0 0.0
    %224 = vmatprep.subr.mxu0 0.0
    %225 = vmatpush1.msra.mxu0 0.0
    %226 = vmatprep.subr.mxu0 0.0
    %227 = vmatpush1.msra.mxu0 0.0
    %228 = vmatprep.subr.mxu0 0.0
    %229 = vmatpush1.msra.mxu0 0.0
    %230 = vmatprep.subr.mxu0 0.0
    %231 = vmatpush1.msra.mxu0 0.0
    %232 = vmatprep.subr.mxu0 0.0
    %233 = vmatpush1.msra.mxu0 0.0
    %234 = vmatprep.subr.mxu0 0.0
    %235 = vmatpush1.msra.mxu0 0.0
    %236 = vmatprep.subr.mxu0 0.0
    %237 = vmatpush1.msra.mxu0 0.0
    %238 = vmatprep.subr.mxu0 0.0
    %239 = vmatpush1.msra.mxu0 0.0
    %240 = vmatprep.subr.mxu0 0.0
    %241 = vmatpush1.msra.mxu0 0.0
    %242 = vmatprep.subr.mxu0 0.0
    %243 = vmatpush1.msra.mxu0 0.0
    %244 = vmatprep.subr.mxu0 0.0
    %245 = vmatpush1.msra.mxu0 0.0
    %v246 = vand.u32 %v51, 4294901760
    %v247 = vsub.f32 %v51, %v246
    %248 = vmatprep.subr.mxu0 %v247
    %v249 = vand.u32 %v50, 4294901760
    %v250 = vsub.f32 %v50, %v249
    %251 = vmatpush1.msra.mxu0 %v250
    %252 = vmatprep.subr.mxu0 0.0
    %253 = vmatpush2.msra.mxu0 0.0
    %254 = vmatprep.subr.mxu0 0.0
    %255 = vmatpush2.msra.mxu0 0.0
    %256 = vmatprep.subr.mxu0 0.0
    %257 = vmatpush2.msra.mxu0 0.0
    %258 = vmatprep.subr.mxu0 0.0
    %259 = vmatpush2.msra.mxu0 0.0
    %260 = vmatprep.subr.mxu0 0.0
    %261 = vmatpush2.msra.mxu0 0.0
    %262 = vmatprep.subr.mxu0 0.0
    %263 = vmatpush2.msra.mxu0 0.0
    %264 = vmatprep.subr.mxu0 0.0
    %265 = vmatpush2.msra.mxu0 0.0
    %266 = vmatprep.subr.mxu0 0.0
    %267 = vmatpush2.msra.mxu0 0.0
    %268 = vmatprep.subr.mxu0 0.0
    %269 = vmatpush2.msra.mxu0 0.0
    %270 = vmatprep.subr.mxu0 0.0
    %271 = vmatpush2.msra.mxu0 0.0
    %272 = vmatprep.subr.mxu0 0.0
    %273 = vmatpush2.msra.mxu0 0.0
    %274 = vmatprep.subr.mxu0 0.0
    %275 = vmatpush2.msra.mxu0 0.0
    %276 = vmatprep.subr.mxu0 0.0
    %277 = vmatpush2.msra.mxu0 0.0
    %278 = vmatprep.subr.mxu0 0.0
    %279 = vmatpush2.msra.mxu0 0.0
    %280 = vmatprep.subr.mxu0 0.0
    %281 = vmatpush2.msra.mxu0 0.0
    %282 = vmatprep.subr.mxu0 0.0
    %283 = vmatpush2.msra.mxu0 0.0
    %284 = vmatprep.mubr.f32.mxu0 0.0
    %v285 = vand.u32 %v54, 4294901760
    %v286 = vsub.f32 %v54, %v285
    %287 = vmatmul.mubr.f32.gmra.mxu0 %v286
    %v288 = vpop.f32.mrf.mxu0
    %v289 = vadd.f32 %v212, %v288
    %v290 = vpop.f32.mrf.mxu0
    %v291 = vadd.f32 %v214, %v290
    %292 = vdwg.mxu0
    %293 = vmatprep.subr.mxu0 0.0
    %294 = vmatpush1.msra.mxu0 0.0
    %295 = vmatprep.subr.mxu0 0.0
    %296 = vmatpush1.msra.mxu0 0.0
    %297 = vmatprep.subr.mxu0 0.0
    %298 = vmatpush1.msra.mxu0 0.0
    %299 = vmatprep.subr.mxu0 0.0
    %300 = vmatpush1.msra.mxu0 0.0
    %301 = vmatprep.subr.mxu0 0.0
    %302 = vmatpush1.msra.mxu0 0.0
    %303 = vmatprep.subr.mxu0 0.0
    %304 = vmatpush1.msra.mxu0 0.0
    %305 = vmatprep.subr.mxu0 0.0
    %306 = vmatpush1.msra.mxu0 0.0
    %307 = vmatprep.subr.mxu0 0.0
    %308 = vmatpush1.msra.mxu0 0.0
    %309 = vmatprep.subr.mxu0 0.0
    %310 = vmatpush1.msra.mxu0 0.0
    %311 = vmatprep.subr.mxu0 0.0
    %312 = vmatpush1.msra.mxu0 0.0
    %313 = vmatprep.subr.mxu0 0.0
    %314 = vmatpush1.msra.mxu0 0.0
    %315 = vmatprep.subr.mxu0 0.0
    %316 = vmatpush1.msra.mxu0 0.0
    %317 = vmatprep.subr.mxu0 0.0
    %318 = vmatpush1.msra.mxu0 0.0
    %319 = vmatprep.subr.mxu0 0.0
    %320 = vmatpush1.msra.mxu0 0.0
    %321 = vmatprep.subr.mxu0 0.0
    %322 = vmatpush1.msra.mxu0 0.0
    %v323 = vand.u32 %v51, 4294901760
    %324 = vmatprep.subr.mxu0 %v323
    %v325 = vand.u32 %v50, 4294901760
    %326 = vmatpush1.msra.mxu0 %v325
    %327 = vmatprep.subr.mxu0 0.0
    %328 = vmatpush2.msra.mxu0 0.0
    %329 = vmatprep.subr.mxu0 0.0
    %330 = vmatpush2.msra.mxu0 0.0
    %331 = vmatprep.subr.mxu0 0.0
    %332 = vmatpush2.msra.mxu0 0.0
    %333 = vmatprep.subr.mxu0 0.0
    %334 = vmatpush2.msra.mxu0 0.0
    %335 = vmatprep.subr.mxu0 0.0
    %336 = vmatpush2.msra.mxu0 0.0
    %337 = vmatprep.subr.mxu0 0.0
    %338 = vmatpush2.msra.mxu0 0.0
    %339 = vmatprep.subr.mxu0 0.0
    %340 = vmatpush2.msra.mxu0 0.0
    %341 = vmatprep.subr.mxu0 0.0
    %342 = vmatpush2.msra.mxu0 0.0
    %343 = vmatprep.subr.mxu0 0.0
    %344 = vmatpush2.msra.mxu0 0.0
    %345 = vmatprep.subr.mxu0 0.0
    %346 = vmatpush2.msra.mxu0 0.0
    %347 = vmatprep.subr.mxu0 0.0
    %348 = vmatpush2.msra.mxu0 0.0
    %349 = vmatprep.subr.mxu0 0.0
    %350 = vmatpush2.msra.mxu0 0.0
    %351 = vmatprep.subr.mxu0 0.0
    %352 = vmatpush2.msra.mxu0 0.0
    %353 = vmatprep.subr.mxu0 0.0
    %354 = vmatpush2.msra.mxu0 0.0
    %355 = vmatprep.subr.mxu0 0.0
    %356 = vmatpush2.msra.mxu0 0.0
    %357 = vmatprep.subr.mxu0 0.0
    %358 = vmatpush2.msra.mxu0 0.0
    %359 = vmatprep.mubr.f32.mxu0 0.0
    %v360 = vand.u32 %v54, 4294901760
    %v361 = vsub.f32 %v54, %v360
    %v362 = vand.u32 %v361, 4294901760
    %363 = vmatmul.mubr.f32.gmra.mxu0 %v362
    %v364 = vpop.f32.mrf.mxu0
    %v365 = vadd.f32 %v289, %v364
    %v366 = vpop.f32.mrf.mxu0
    %v367 = vadd.f32 %v291, %v366
    %368 = vdwg.mxu0
    %369 = vmatprep.subr.mxu0 0.0
    %370 = vmatpush1.msra.mxu0 0.0
    %371 = vmatprep.subr.mxu0 0.0
    %372 = vmatpush1.msra.mxu0 0.0
    %373 = vmatprep.subr.mxu0 0.0
    %374 = vmatpush1.msra.mxu0 0.0
    %375 = vmatprep.subr.mxu0 0.0
    %376 = vmatpush1.msra.mxu0 0.0
    %377 = vmatprep.subr.mxu0 0.0
    %378 = vmatpush1.msra.mxu0 0.0
    %379 = vmatprep.subr.mxu0 0.0
    %380 = vmatpush1.msra.mxu0 0.0
    %381 = vmatprep.subr.mxu0 0.0
    %382 = vmatpush1.msra.mxu0 0.0
    %383 = vmatprep.subr.mxu0 0.0
    %384 = vmatpush1.msra.mxu0 0.0
    %385 = vmatprep.subr.mxu0 0.0
    %386 = vmatpush1.msra.mxu0 0.0
    %387 = vmatprep.subr.mxu0 0.0
    %388 = vmatpush1.msra.mxu0 0.0
    %389 = vmatprep.subr.mxu0 0.0
    %390 = vmatpush1.msra.mxu0 0.0
    %391 = vmatprep.subr.mxu0 0.0
    %392 = vmatpush1.msra.mxu0 0.0
    %393 = vmatprep.subr.mxu0 0.0
    %394 = vmatpush1.msra.mxu0 0.0
    %395 = vmatprep.subr.mxu0 0.0
    %396 = vmatpush1.msra.mxu0 0.0
    %397 = vmatprep.subr.mxu0 0.0
    %398 = vmatpush1.msra.mxu0 0.0
    %v399 = vand.u32 %v51, 4294901760
    %v400 = vsub.f32 %v51, %v399
    %v401 = vand.u32 %v400, 4294901760
    %402 = vmatprep.subr.mxu0 %v401
    %v403 = vand.u32 %v50, 4294901760
    %v404 = vsub.f32 %v50, %v403
    %v405 = vand.u32 %v404, 4294901760
    %406 = vmatpush1.msra.mxu0 %v405
    %407 = vmatprep.subr.mxu0 0.0
    %408 = vmatpush2.msra.mxu0 0.0
    %409 = vmatprep.subr.mxu0 0.0
    %410 = vmatpush2.msra.mxu0 0.0
    %411 = vmatprep.subr.mxu0 0.0
    %412 = vmatpush2.msra.mxu0 0.0
    %413 = vmatprep.subr.mxu0 0.0
    %414 = vmatpush2.msra.mxu0 0.0
    %415 = vmatprep.subr.mxu0 0.0
    %416 = vmatpush2.msra.mxu0 0.0
    %417 = vmatprep.subr.mxu0 0.0
    %418 = vmatpush2.msra.mxu0 0.0
    %419 = vmatprep.subr.mxu0 0.0
    %420 = vmatpush2.msra.mxu0 0.0
    %421 = vmatprep.subr.mxu0 0.0
    %422 = vmatpush2.msra.mxu0 0.0
    %423 = vmatprep.subr.mxu0 0.0
    %424 = vmatpush2.msra.mxu0 0.0
    %425 = vmatprep.subr.mxu0 0.0
    %426 = vmatpush2.msra.mxu0 0.0
    %427 = vmatprep.subr.mxu0 0.0
    %428 = vmatpush2.msra.mxu0 0.0
    %429 = vmatprep.subr.mxu0 0.0
    %430 = vmatpush2.msra.mxu0 0.0
    %431 = vmatprep.subr.mxu0 0.0
    %432 = vmatpush2.msra.mxu0 0.0
    %433 = vmatprep.subr.mxu0 0.0
    %434 = vmatpush2.msra.mxu0 0.0
    %435 = vmatprep.subr.mxu0 0.0
    %436 = vmatpush2.msra.mxu0 0.0
    %437 = vmatprep.subr.mxu0 0.0
    %438 = vmatpush2.msra.mxu0 0.0
    %439 = vmatprep.mubr.f32.mxu0 0.0
    %v440 = vand.u32 %v54, 4294901760
    %441 = vmatmul.mubr.f32.gmra.mxu0 %v440
    %v442 = vpop.f32.mrf.mxu0
    %v443 = vadd.f32 %v365, %v442
    %v444 = vpop.f32.mrf.mxu0
    %v445 = vadd.f32 %v367, %v444
    %446 = vdwg.mxu0
    %447 = vmatprep.subr.mxu0 0.0
    %448 = vmatpush1.msra.mxu0 0.0
    %449 = vmatprep.subr.mxu0 0.0
    %450 = vmatpush1.msra.mxu0 0.0
    %451 = vmatprep.subr.mxu0 0.0
    %452 = vmatpush1.msra.mxu0 0.0
    %453 = vmatprep.subr.mxu0 0.0
    %454 = vmatpush1.msra.mxu0 0.0
    %455 = vmatprep.subr.mxu0 0.0
    %456 = vmatpush1.msra.mxu0 0.0
    %457 = vmatprep.subr.mxu0 0.0
    %458 = vmatpush1.msra.mxu0 0.0
    %459 = vmatprep.subr.mxu0 0.0
    %460 = vmatpush1.msra.mxu0 0.0
    %461 = vmatprep.subr.mxu0 0.0
    %462 = vmatpush1.msra.mxu0 0.0
    %463 = vmatprep.subr.mxu0 0.0
    %464 = vmatpush1.msra.mxu0 0.0
    %465 = vmatprep.subr.mxu0 0.0
    %466 = vmatpush1.msra.mxu0 0.0
    %467 = vmatprep.subr.mxu0 0.0
    %468 = vmatpush1.msra.mxu0 0.0
    %469 = vmatprep.subr.mxu0 0.0
    %470 = vmatpush1.msra.mxu0 0.0
    %471 = vmatprep.subr.mxu0 0.0
    %472 = vmatpush1.msra.mxu0 0.0
    %473 = vmatprep.subr.mxu0 0.0
    %474 = vmatpush1.msra.mxu0 0.0
    %475 = vmatprep.subr.mxu0 0.0
    %476 = vmatpush1.msra.mxu0 0.0
    %v477 = vand.u32 %v51, 4294901760
    %478 = vmatprep.subr.mxu0 %v477
    %v479 = vand.u32 %v50, 4294901760
    %480 = vmatpush1.msra.mxu0 %v479
    %481 = vmatprep.subr.mxu0 0.0
    %482 = vmatpush2.msra.mxu0 0.0
    %483 = vmatprep.subr.mxu0 0.0
    %484 = vmatpush2.msra.mxu0 0.0
    %485 = vmatprep.subr.mxu0 0.0
    %486 = vmatpush2.msra.mxu0 0.0
    %487 = vmatprep.subr.mxu0 0.0
    %488 = vmatpush2.msra.mxu0 0.0
    %489 = vmatprep.subr.mxu0 0.0
    %490 = vmatpush2.msra.mxu0 0.0
    %491 = vmatprep.subr.mxu0 0.0
    %492 = vmatpush2.msra.mxu0 0.0
    %493 = vmatprep.subr.mxu0 0.0
    %494 = vmatpush2.msra.mxu0 0.0
    %495 = vmatprep.subr.mxu0 0.0
    %496 = vmatpush2.msra.mxu0 0.0
    %497 = vmatprep.subr.mxu0 0.0
    %498 = vmatpush2.msra.mxu0 0.0
    %499 = vmatprep.subr.mxu0 0.0
    %500 = vmatpush2.msra.mxu0 0.0
    %501 = vmatprep.subr.mxu0 0.0
    %502 = vmatpush2.msra.mxu0 0.0
    %503 = vmatprep.subr.mxu0 0.0
    %504 = vmatpush2.msra.mxu0 0.0
    %505 = vmatprep.subr.mxu0 0.0
    %506 = vmatpush2.msra.mxu0 0.0
    %507 = vmatprep.subr.mxu0 0.0
    %508 = vmatpush2.msra.mxu0 0.0
    %509 = vmatprep.subr.mxu0 0.0
    %510 = vmatpush2.msra.mxu0 0.0
    %511 = vmatprep.subr.mxu0 0.0
    %512 = vmatpush2.msra.mxu0 0.0
    %513 = vmatprep.mubr.f32.mxu0 0.0
    %v514 = vand.u32 %v54, 4294901760
    %515 = vmatmul.mubr.f32.gmra.mxu0 %v514
    %v516 = vpop.f32.mrf.mxu0
    %v517 = vadd.f32 %v443, %v516
    %v518 = vpop.f32.mrf.mxu0
    %v519 = vadd.f32 %v445, %v518
    %520 = vdwg.mxu0
    %v521 = vld [vmem:[%s1] sm:$0xf]
    %v524 = vcombine.low %v517, %v519
    %v526 = vunpack.c.l.s4 1983009808
    %v527 = vunpack.c.0.s8 %v526
    %v528 = vlaneseq
    %v529 = vshrl.u32 %v528, 7
    %v530 = vsub.s32 %v527, %v529
    %v531 = vrot.slane %v524, %v530
    %v533 = vmul.f32 %v521, %v531
    %534 = vst [vmem:[#allocation2] sm:$0xf] %v533
    // Predicated region
    $region14: #{tpu_custom_call.1} parent=1 // pred_check
      _
    $region15: #{tpu_custom_call.1} parent=1 // pred_check_branch
      %536 = sbr.rel (0) target = $region17
    $region16: #{tpu_custom_call.1} parent=1 // pred_region
      %s538 = ssub.s32 64, 64
      %539 = vsyncadd [#allocation3], %s538
      %s541 = sshll.u32 [#allocation2], 4
      %s542 = int_to_ptr.vmem [resolvable:$true] %s541
      %544 = dma.vmem_to_hbm [thread:$0]  %s542, 64, %s3, [#allocation3]
    $region17: #{tpu_custom_call.1} parent=1 // pred_fallthru
      _
    // Predicated region
    $region18: #{tpu_custom_call.1} parent=1 // pred_check
      _
    $region19: #{tpu_custom_call.1} parent=1 // pred_check_branch
      %546 = sbr.rel (0) target = $region21
    $region20: #{tpu_custom_call.1} parent=1 // pred_region
      %547 = dma.done [#allocation3], 64
    $region21: #{tpu_custom_call.1} parent=1 // pred_fallthru
      _
    %548 = vsyncpa [#allocation3], 1

</llo_original>
